<compile_context>
chip_gen: v7x
topology: tpu7x:2x2x1
jax: 0.10.0
libtpu: 0.0.40
codegen_flags: <defaults>
</compile_context>

<pallas_src>
import functools

import jax
import jax.numpy as jnp
import numpy as np
from jax.experimental import pallas as pl
from jax.experimental.pallas import tpu as pltpu


def _dice_sums_kernel(pred_ref, true_ref, out_ref, inter_acc, card_acc,
                      *, s_total, tiles_per_core):
    # pred_ref : (1, C, TS) logits tile (native dtype) for one batch element
    # true_ref : (1, 1, TS) integer class labels tile (native dtype)
    # out_ref  : (1, C, 2) per-core partial sums; col 0 = intersection, col 1 = cardinality
    # inter_acc, card_acc: (C, 1) f32 VMEM scratch accumulators (persist across grid steps)
    c = pl.program_id(0)   # megacore partition ("parallel")
    n = pl.program_id(1)   # batch ("arbitrary")
    t = pl.program_id(2)   # spatial tile within this core's slice ("arbitrary", innermost)
    last_n = pl.num_programs(1) - 1
    last_t = pl.num_programs(2) - 1

    @pl.when((n == 0) & (t == 0))
    def _():
        inter_acc[...] = jnp.zeros_like(inter_acc)
        card_acc[...] = jnp.zeros_like(card_acc)

    logits = pred_ref[0].astype(jnp.float32)             # (C, TS)
    C, TS = logits.shape

    # softmax over the channel axis (axis=0 here == dim=1 in NCHW)
    m = jnp.max(logits, axis=0, keepdims=True)           # (1, TS)
    e = jnp.exp(logits - m)                               # (C, TS)
    # approx=False: keep the final loss within the 1e-5 reference tolerance.
    p = e * pl.reciprocal(jnp.sum(e, axis=0, keepdims=True), approx=False)

    # one-hot of labels, built in-kernel via iota comparison (cast from narrow dtype here)
    labels = true_ref[0].astype(jnp.int32)                # (1, TS)
    class_ids = jax.lax.broadcasted_iota(jnp.int32, (C, TS), 0)
    onehot = (labels == class_ids).astype(jnp.float32)    # (C, TS)

    # Mask out columns beyond the true spatial extent: edge-tile padding and
    # (for the last core) clamped out-of-range tiles. jnp.where also keeps any
    # NaN/Inf arising from undefined padding values out of the sums.
    col0 = (c * tiles_per_core + t) * TS                  # unclamped global column start
    col = col0 + jax.lax.broadcasted_iota(jnp.int32, (1, TS), 1)
    valid = col < s_total                                  # (1, TS) bool
    p = jnp.where(valid, p, 0.0)
    onehot = jnp.where(valid, onehot, 0.0)

    inter_acc[...] += jnp.sum(p * onehot, axis=1, keepdims=True)   # (C, 1)
    card_acc[...] += jnp.sum(p + onehot, axis=1, keepdims=True)    # (C, 1)

    # Single lane-sparse store per core (not per step).
    @pl.when((n == last_n) & (t == last_t))
    def _():
        out_ref[0] = jnp.concatenate([inter_acc[...], card_acc[...]], axis=1)  # (C, 2)


def dice_loss_multiclass(y_pred, y_true, *, log_loss=False, smooth=0.0, eps=1e-7,
                         spatial_tile=2048, num_cores=2):
    """y_pred: (N, C, *spatial) logits (any float dtype);
    y_true: (N, *spatial) integer labels (any int dtype). Returns scalar loss."""
    N = y_pred.shape[0]
    C = y_pred.shape[1]
    S = int(np.prod(y_pred.shape[2:]))

    # Stream inputs in their native dtypes (bf16 logits / int8 labels cut HBM
    # traffic); all casts happen inside the kernel.
    pred = jnp.reshape(y_pred, (N, C, S))
    true = jnp.reshape(y_true, (N, 1, S))

    # Spatial tile: full extent when small (exact, no masking work), otherwise a
    # 128-aligned tile sized so 2x double-buffered (pred + labels) tiles stay far
    # below the scoped-VMEM limit on all of v5e/v6e/v7x.
    if S <= spatial_tile:
        TS = S
    else:
        TS = spatial_tile                      # multiple of 128

    NT = pl.cdiv(S, TS)                        # actual number of spatial tiles
    NC = min(num_cores, NT)                    # megacore partitions (v7x: 2 TCs)
    T = pl.cdiv(NT, NC)                        # spatial tiles handled per core

    def data_index(c, n, t):
        # Clamp tiles past the end (last core may have fewer real tiles); the
        # kernel fully masks those columns, so the duplicated data is discarded.
        return (n, 0, jnp.minimum(c * T + t, NT - 1))

    kernel = functools.partial(_dice_sums_kernel, s_total=S, tiles_per_core=T)

    bytes_accessed = (int(pred.size) * pred.dtype.itemsize
                      + int(true.size) * true.dtype.itemsize
                      + NC * C * 2 * 4)

    partials = pl.pallas_call(
        kernel,
        out_shape=jax.ShapeDtypeStruct((NC, C, 2), jnp.float32),
        grid=(NC, N, T),
        in_specs=[
            pl.BlockSpec((1, C, TS), data_index),
            pl.BlockSpec((1, 1, TS), data_index),
        ],
        out_specs=pl.BlockSpec((1, C, 2), lambda c, n, t: (c, 0, 0)),
        scratch_shapes=[
            pltpu.VMEM((C, 1), jnp.float32),   # intersection accumulator
            pltpu.VMEM((C, 1), jnp.float32),   # cardinality accumulator
        ],
        compiler_params=pltpu.CompilerParams(
            dimension_semantics=("parallel", "arbitrary", "arbitrary")),
        cost_estimate=pl.CostEstimate(
            flops=8 * N * C * S,
            transcendentals=N * C * S,
            bytes_accessed=bytes_accessed),
    )(pred, true)

    sums = jnp.sum(partials, axis=0)           # (C, 2) reduce per-core partials
    intersection = sums[:, 0]
    cardinality = sums[:, 1]
    scores = (2.0 * intersection + smooth) / jnp.maximum(cardinality + smooth, eps)
    if log_loss:
        loss = -jnp.log(jnp.maximum(scores, eps))
    else:
        loss = 1.0 - scores
    return jnp.mean(loss)


def _reference_dice_loss(y_pred, y_true, *, log_loss=False, smooth=0.0, eps=1e-7):
    # Pure-JAX reference of the PyTorch forward, for a sanity check.
    N, C = y_pred.shape[0], y_pred.shape[1]
    p = jax.nn.softmax(y_pred.astype(jnp.float32), axis=1).reshape(N, C, -1)
    t = jax.nn.one_hot(y_true.reshape(N, -1), C, axis=1, dtype=jnp.float32)
    inter = jnp.sum(p * t, axis=(0, 2))
    card = jnp.sum(p + t, axis=(0, 2))
    scores = (2.0 * inter + smooth) / jnp.maximum(card + smooth, eps)
    loss = -jnp.log(jnp.maximum(scores, eps)) if log_loss else 1.0 - scores
    return jnp.mean(loss)


if __name__ == "__main__":
    key = jax.random.PRNGKey(0)
    k1, k2, k3, k4 = jax.random.split(key, 4)

    # Small case (single spatial tile, single core partition).
    N, C, H, W = 2, 4, 16, 16
    y_pred = jax.random.normal(k1, (N, C, H, W), dtype=jnp.float32)
    y_true = jax.random.randint(k2, (N, H, W), 0, C, dtype=jnp.int32)

    loss = jax.block_until_ready(dice_loss_multiclass(y_pred, y_true))
    ref = jax.block_until_ready(_reference_dice_loss(y_pred, y_true))
    np.testing.assert_allclose(np.asarray(loss), np.asarray(ref), rtol=1e-5, atol=1e-6)

    # Larger case exercising spatial tiling, the partial edge tile mask and the
    # two-partition ("megacore") path with a clamped out-of-range tile.
    H2 = W2 = 72                                    # S = 5184 > TS = 2048
    y_pred2 = jax.random.normal(k3, (N, C, H2, W2), dtype=jnp.float32)
    y_true2 = jax.random.randint(k4, (N, H2, W2), 0, C, dtype=jnp.int32)

    loss2 = jax.block_until_ready(dice_loss_multiclass(y_pred2, y_true2))
    ref2 = jax.block_until_ready(_reference_dice_loss(y_pred2, y_true2))
    np.testing.assert_allclose(np.asarray(loss2), np.asarray(ref2), rtol=1e-5, atol=1e-6)

    print("KERNEL_OK")
</pallas_src>

<mosaic_0001>
module attributes {stable_mosaic.version = 11 : i64} {
  func.func @_dice_sums_kernel(%arg0: i32, %arg1: i32, %arg2: i32, %arg3: memref<1x4x256xf32, #tpu.memory_space<vmem>>, %arg4: memref<1x1x256xi32, #tpu.memory_space<vmem>>, %arg5: memref<1x4x2xf32, #tpu.memory_space<vmem>>, %arg6: memref<4x1xf32, #tpu.memory_space<vmem>>, %arg7: memref<4x1xf32, #tpu.memory_space<vmem>>) attributes {dimension_semantics = [#tpu.dimension_semantics<parallel>, #tpu.dimension_semantics<arbitrary>, #tpu.dimension_semantics<arbitrary>], iteration_bounds = array<i64: 1, 2, 1>, scalar_prefetch = 0 : i64, scratch_operands = 2 : i64, tpu.core_type = #tpu.core_type<tc>, window_params = [{transform_indices = @transform_0, window_bounds = array<i64: 1, 4, 256>}, {transform_indices = @transform_1, window_bounds = array<i64: 1, 1, 256>}, {transform_indices = @transform_2, window_bounds = array<i64: 1, 4, 2>}]} {
    %c0_i32 = arith.constant 0 : i32
    %0 = arith.cmpi eq, %arg1, %c0_i32 : i32
    %c0_i32_0 = arith.constant 0 : i32
    %1 = arith.cmpi eq, %arg2, %c0_i32_0 : i32
    %2 = arith.andi %0, %1 : i1
    %3 = arith.extui %2 : i1 to i32
    %c0_i32_1 = arith.constant 0 : i32
    %4 = arith.cmpi ne, %3, %c0_i32_1 : i32
    scf.if %4 {
      %cst_24 = arith.constant 0.000000e+00 : f32
      %57 = vector.broadcast %cst_24 : f32 to vector<4x1xf32>
      %c0_25 = arith.constant 0 : index
      %c0_26 = arith.constant 0 : index
      %58 = vector.load %arg6[%c0_25, %c0_26] : memref<4x1xf32, #tpu.memory_space<vmem>>, vector<4x1xf32>
      tpu.vector_store %arg6[%c0_25, %c0_26], %57 {strides = array<i32>} : memref<4x1xf32, #tpu.memory_space<vmem>>, vector<4x1xf32>,
      %cst_27 = arith.constant 0.000000e+00 : f32
      %59 = vector.broadcast %cst_27 : f32 to vector<4x1xf32>
      %c0_28 = arith.constant 0 : index
      %c0_29 = arith.constant 0 : index
      %60 = vector.load %arg7[%c0_28, %c0_29] : memref<4x1xf32, #tpu.memory_space<vmem>>, vector<4x1xf32>
      tpu.vector_store %arg7[%c0_28, %c0_29], %59 {strides = array<i32>} : memref<4x1xf32, #tpu.memory_space<vmem>>, vector<4x1xf32>,
    } else {
    }
    %c0 = arith.constant 0 : index
    %c0_2 = arith.constant 0 : index
    %c0_3 = arith.constant 0 : index
    %5 = vector.load %arg3[%c0, %c0_2, %c0_3] : memref<1x4x256xf32, #tpu.memory_space<vmem>>, vector<1x4x256xf32>
    %6 = vector.shape_cast %5 : vector<1x4x256xf32> to vector<4x256xf32>
    %cst = arith.constant dense<0xFF800000> : vector<256xf32>
    %7 = vector.multi_reduction <maximumf>, %6, %cst [0] : vector<4x256xf32> to vector<256xf32>
    %8 = vector.shape_cast %7 : vector<256xf32> to vector<1x256xf32>
    %9 = vector.broadcast %8 : vector<1x256xf32> to vector<4x256xf32>
    %10 = arith.subf %6, %9 : vector<4x256xf32>
    %11 = math.exp %10 : vector<4x256xf32>
    %cst_4 = arith.constant dense<0.000000e+00> : vector<256xf32>
    %12 = vector.multi_reduction <add>, %11, %cst_4 [0] : vector<4x256xf32> to vector<256xf32>
    %13 = vector.shape_cast %12 : vector<256xf32> to vector<1x256xf32>
    %14 = tpu.reciprocal %13 : vector<1x256xf32> -> vector<1x256xf32>
    %15 = vector.broadcast %14 : vector<1x256xf32> to vector<4x256xf32>
    %16 = arith.mulf %11, %15 : vector<4x256xf32>
    %c0_5 = arith.constant 0 : index
    %c0_6 = arith.constant 0 : index
    %c0_7 = arith.constant 0 : index
    %17 = vector.load %arg4[%c0_5, %c0_6, %c0_7] : memref<1x1x256xi32, #tpu.memory_space<vmem>>, vector<1x1x256xi32>
    %18 = vector.shape_cast %17 : vector<1x1x256xi32> to vector<1x256xi32>
    %19 = tpu.iota {dimensions = array<i32: 0>} : vector<4x256xi32>
    %20 = vector.broadcast %18 : vector<1x256xi32> to vector<4x256xi32>
    %21 = arith.cmpi eq, %20, %19 : vector<4x256xi32>
    %22 = arith.extui %21 : vector<4x256xi1> to vector<4x256xi32>
    %23 = arith.sitofp %22 : vector<4x256xi32> to vector<4x256xf32>
    %c1_i32 = arith.constant 1 : i32
    %24 = arith.muli %arg0, %c1_i32 : i32
    %25 = arith.addi %24, %arg2 : i32
    %c256_i32 = arith.constant 256 : i32
    %26 = arith.muli %25, %c256_i32 : i32
    %27 = tpu.iota {dimensions = array<i32: 1>} : vector<1x256xi32>
    %28 = vector.broadcast %26 : i32 to vector<1x256xi32>
    %29 = arith.addi %28, %27 : vector<1x256xi32>
    %c256_i32_8 = arith.constant 256 : i32
    %30 = vector.broadcast %c256_i32_8 : i32 to vector<1x256xi32>
    %31 = arith.cmpi slt, %29, %30 : vector<1x256xi32>
    %cst_9 = arith.constant 0.000000e+00 : f32
    %32 = vector.shape_cast %31 : vector<1x256xi1> to vector<1x256xi1>
    %33 = vector.broadcast %32 : vector<1x256xi1> to vector<4x256xi1>
    %34 = vector.broadcast %cst_9 : f32 to vector<4x256xf32>
    %35 = arith.select %33, %16, %34 : vector<4x256xi1>, vector<4x256xf32>
    %cst_10 = arith.constant 0.000000e+00 : f32
    %36 = vector.shape_cast %31 : vector<1x256xi1> to vector<1x256xi1>
    %37 = vector.broadcast %36 : vector<1x256xi1> to vector<4x256xi1>
    %38 = vector.broadcast %cst_10 : f32 to vector<4x256xf32>
    %39 = arith.select %37, %23, %38 : vector<4x256xi1>, vector<4x256xf32>
    %c0_11 = arith.constant 0 : index
    %c0_12 = arith.constant 0 : index
    %40 = vector.load %arg6[%c0_11, %c0_12] : memref<4x1xf32, #tpu.memory_space<vmem>>, vector<4x1xf32>
    %41 = arith.mulf %35, %39 : vector<4x256xf32>
    %cst_13 = arith.constant dense<0.000000e+00> : vector<4xf32>
    %42 = vector.multi_reduction <add>, %41, %cst_13 [1] : vector<4x256xf32> to vector<4xf32>
    %43 = vector.shape_cast %42 : vector<4xf32> to vector<4x1xf32>
    %44 = arith.addf %40, %43 : vector<4x1xf32>
    %c0_14 = arith.constant 0 : index
    %c0_15 = arith.constant 0 : index
    %45 = vector.load %arg6[%c0_14, %c0_15] : memref<4x1xf32, #tpu.memory_space<vmem>>, vector<4x1xf32>
    tpu.vector_store %arg6[%c0_14, %c0_15], %44 {strides = array<i32>} : memref<4x1xf32, #tpu.memory_space<vmem>>, vector<4x1xf32>,
    %c0_16 = arith.constant 0 : index
    %c0_17 = arith.constant 0 : index
    %46 = vector.load %arg7[%c0_16, %c0_17] : memref<4x1xf32, #tpu.memory_space<vmem>>, vector<4x1xf32>
    %47 = arith.addf %35, %39 : vector<4x256xf32>
    %cst_18 = arith.constant dense<0.000000e+00> : vector<4xf32>
    %48 = vector.multi_reduction <add>, %47, %cst_18 [1] : vector<4x256xf32> to vector<4xf32>
    %49 = vector.shape_cast %48 : vector<4xf32> to vector<4x1xf32>
    %50 = arith.addf %46, %49 : vector<4x1xf32>
    %c0_19 = arith.constant 0 : index
    %c0_20 = arith.constant 0 : index
    %51 = vector.load %arg7[%c0_19, %c0_20] : memref<4x1xf32, #tpu.memory_space<vmem>>, vector<4x1xf32>
    tpu.vector_store %arg7[%c0_19, %c0_20], %50 {strides = array<i32>} : memref<4x1xf32, #tpu.memory_space<vmem>>, vector<4x1xf32>,
    %c1_i32_21 = arith.constant 1 : i32
    %52 = arith.cmpi eq, %arg1, %c1_i32_21 : i32
    %c0_i32_22 = arith.constant 0 : i32
    %53 = arith.cmpi eq, %arg2, %c0_i32_22 : i32
    %54 = arith.andi %52, %53 : i1
    %55 = arith.extui %54 : i1 to i32
    %c0_i32_23 = arith.constant 0 : i32
    %56 = arith.cmpi ne, %55, %c0_i32_23 : i32
    scf.if %56 {
      %c0_24 = arith.constant 0 : index
      %c0_25 = arith.constant 0 : index
      %57 = vector.load %arg6[%c0_24, %c0_25] : memref<4x1xf32, #tpu.memory_space<vmem>>, vector<4x1xf32>
      %c0_26 = arith.constant 0 : index
      %c0_27 = arith.constant 0 : index
      %58 = vector.load %arg7[%c0_26, %c0_27] : memref<4x1xf32, #tpu.memory_space<vmem>>, vector<4x1xf32>
      %59 = tpu.concatenate %57, %58 in 1 : vector<4x1xf32>, vector<4x1xf32> -> vector<4x2xf32>
      %c0_28 = arith.constant 0 : index
      %c0_29 = arith.constant 0 : index
      %c0_30 = arith.constant 0 : index
      %60 = vector.load %arg5[%c0_28, %c0_29, %c0_30] : memref<1x4x2xf32, #tpu.memory_space<vmem>>, vector<1x4x2xf32>
      %61 = vector.shape_cast %60 : vector<1x4x2xf32> to vector<4x2xf32>
      %62 = vector.shape_cast %59 : vector<4x2xf32> to vector<1x4x2xf32>
      tpu.vector_store %arg5[%c0_28, %c0_29, %c0_30], %62 {strides = array<i32>} : memref<1x4x2xf32, #tpu.memory_space<vmem>>, vector<1x4x2xf32>,
    } else {
    }
    return
  }
  func.func @transform_0(%arg0: i32, %arg1: i32, %arg2: i32) -> (i32, i32, i32) {
    %c1_i32 = arith.constant 1 : i32
    %0 = arith.muli %arg0, %c1_i32 : i32
    %1 = arith.addi %0, %arg2 : i32
    %c0_i32 = arith.constant 0 : i32
    %2 = arith.minsi %1, %c0_i32 : i32
    %c0_i32_0 = arith.constant 0 : i32
    %c0_i32_1 = arith.constant 0 : i32
    return %arg1, %c0_i32_0, %2 : i32, i32, i32
  }
  func.func @transform_1(%arg0: i32, %arg1: i32, %arg2: i32) -> (i32, i32, i32) {
    %c1_i32 = arith.constant 1 : i32
    %0 = arith.muli %arg0, %c1_i32 : i32
    %1 = arith.addi %0, %arg2 : i32
    %c0_i32 = arith.constant 0 : i32
    %2 = arith.minsi %1, %c0_i32 : i32
    %c0_i32_0 = arith.constant 0 : i32
    %c0_i32_1 = arith.constant 0 : i32
    return %arg1, %c0_i32_0, %2 : i32, i32, i32
  }
  func.func @transform_2(%arg0: i32, %arg1: i32, %arg2: i32) -> (i32, i32, i32) {
    %c0_i32 = arith.constant 0 : i32
    %c0_i32_0 = arith.constant 0 : i32
    %c0_i32_1 = arith.constant 0 : i32
    return %arg0, %c0_i32, %c0_i32_0 : i32, i32, i32
  }
}

</mosaic_0001>

<llo_original>
// kernel: tpu_custom_call.1
$region0: #{tpu_custom_call.1}
  #allocation0 [shape = 'u32[]', space=smem, size = 0x4, offset = 0x4, fixed_abs, tag = 'smem constant byte address 0x4 - core index']
  #allocation1 [shape = 'u32[144,128]{1,0:T(1,128)}', space=vmem, size = 0x12000, scoped, tag = 'internal scratch']
  #allocation2 [shape = 'f32[4,1]{1,0:T(4,128)}', space=vmem, size = 0x800, scoped, tag = 'scratch operand']
  #allocation3 [shape = 'f32[4,1]{1,0:T(4,128)}', space=vmem, size = 0x800, scoped, tag = 'scratch operand']
  %s0 = inlined_call_operand.hbm [shape: f32[2,4,256], index: 0, kind: input, shape index: {}]
  %s1 = inlined_call_operand.hbm [shape: s32[2,1,256], index: 1, kind: input, shape index: {}]
  %s2 = inlined_call_operand.vmem [shape: f32[1,4,2], index: 2, kind: output, shape index: {}]
  %s3 = sld [smem:[#allocation0]]
  $region57: #{tpu_custom_call.1} parent=0
    _
  %s5 = ssub.s32 1, %s3
  %s6 = scalar_select 0, %s5, %s3
  $region1: #{tpu_custom_call.1} parent=0
    #allocation4 [shape = 'u8[8192]{0}', space=vmem, size = 0x2000, scoped, tag = 'input window, operand 0']
    #allocation5 [shape = 's32[2]{0}', space=sflag, size = 0x8, scoped, tag = 'scoped memory for tpu_custom_call.1']
    #allocation6 [shape = 'u8[2048]{0}', space=vmem, size = 0x800, scoped, tag = 'input window, operand 1']
    #allocation7 [shape = 's32[2]{0}', space=sflag, size = 0x8, scoped, tag = 'scoped memory for tpu_custom_call.1']
    %7 = vsyncpa [#allocation5], 0
    %s8 = scalar_lea.sflag [#allocation5], 1
    %9 = vsyncpa %s8, 0
    %10 = vsyncpa [#allocation7], 0
    %s11 = scalar_lea.sflag [#allocation7], 1
    %12 = vsyncpa %s11, 0
    loop: start=0, step=1, limit=4
    $region2: #{tpu_custom_call.1} parent=1 // loop_pre_header
      _
    $region3: #{tpu_custom_call.1} parent=1 // loop_header
      %s14 = sphi 0, %s18
      %p15 = scmp.ge.s32.totalorder %s14, 4
      %s21 = sphi 0, %s40
      %s22 = sphi 0, %s36
      %s23 = sphi 0, %s32
      %s24 = sphi 0, %s21
      %s25 = sphi 0, %s22
      %s26 = sphi 0, %s23
      %s27 = sphi 0, %s24
      %s28 = sphi 0, %s25
      %s29 = sphi 0, %s26
      %s51 = sphi 0, %s53
      %s54 = sphi 0, %s51
      %s55 = sphi 0, %s54
      %s71 = sphi 0, %s55
      %s85 = sphi 0, %s87
      %s88 = sphi 0, %s85
      %s89 = sphi 0, %s88
      %s105 = sphi 0, %s89
      %s111 = sphi 0, %s113
      %s114 = sphi 0, %s111
      %s115 = sphi 0, %s114
      %s131 = sphi 0, %s115
    $region4: #{tpu_custom_call.1} parent=1 // loop_header_branch
      %17 = sbr.rel (%p15) target = $region8
    $region5: #{tpu_custom_call.1} parent=1 // loop_body
      %s19 = ssub.s32 %s14, 1
      %s20 = ssub.s32 %s14, 2
      %s30 = sadd.s32 1, %s23
      %p31 = scmp.ge.s32.totalorder %s30, 1
      %s32 = scalar_select %p31, 0, %s30
      %s33 = sadd.s32 1, %s22
      %s34 = scalar_select %p31, %s33, %s22
      %p35 = scmp.ge.s32.totalorder %s34, 2
      %s36 = scalar_select %p35, 0, %s34
      %s37 = sadd.s32 1, %s21
      %s38 = scalar_select %p35, %s37, %s21
      %p39 = scmp.ge.s32.totalorder %s38, 1
      %s40 = scalar_select %p39, 0, %s38
      %s41 = sadd.s32 %s21, %s23
      %p42 = scmp.lt.s32.totalorder %s41, 0
      %s43 = scalar_select %p42, %s41, 0
      %s44 = sadd.s32 %s40, %s32
      %p45 = scmp.lt.s32.totalorder %s44, 0
      %s46 = scalar_select %p45, %s44, 0
      %s47 = ssub.s32 %s22, %s36
      %s48 = ssub.s32 %s43, %s46
      %s49 = sor.u32 %s47, %s48
      %p50 = scmp.eq.s32.totalorder %s49, 0
      %s52 = sadd.s32 %s51, 1
      %s53 = scalar_select %p50, %s51, %s52
      %p56 = pneg %p50
      %p57 = scmp.eq.s32.totalorder %s14, 1
      %p58 = por %p56, %p57
      %p59 = scmp.ne.s32.totalorder %s51, %s54
      %p60 = scmp.eq.s32.totalorder %s14, 0
      %p61 = por %p59, %p60
      %p62 = scmp.ne.s32.totalorder %s51, %s54
      %p63 = scmp.eq.s32.totalorder %s19, 1
      %p64 = por %p62, %p63
      %p65 = scmp.ne.s32.totalorder %s54, %s55
      %p66 = scmp.eq.s32.totalorder %s19, 0
      %p67 = por %p65, %p66
      %p68 = scmp.ne.s32.totalorder %s54, %s55
      %p69 = scmp.eq.s32.totalorder %s20, 1
      %p70 = por %p68, %p69
      %p72 = scmp.ne.s32.totalorder %s55, %s71
      %p73 = scmp.eq.s32.totalorder %s20, 0
      %p74 = por %p72, %p73
      %s75 = sadd.s32 %s21, %s23
      %p76 = scmp.lt.s32.totalorder %s75, 0
      %s77 = scalar_select %p76, %s75, 0
      %s78 = sadd.s32 %s40, %s32
      %p79 = scmp.lt.s32.totalorder %s78, 0
      %s80 = scalar_select %p79, %s78, 0
      %s81 = ssub.s32 %s22, %s36
      %s82 = ssub.s32 %s77, %s80
      %s83 = sor.u32 %s81, %s82
      %p84 = scmp.eq.s32.totalorder %s83, 0
      %s86 = sadd.s32 %s85, 1
      %s87 = scalar_select %p84, %s85, %s86
      %p90 = pneg %p84
      %p91 = scmp.eq.s32.totalorder %s14, 1
      %p92 = por %p90, %p91
      %p93 = scmp.ne.s32.totalorder %s85, %s88
      %p94 = scmp.eq.s32.totalorder %s14, 0
      %p95 = por %p93, %p94
      %p96 = scmp.ne.s32.totalorder %s85, %s88
      %p97 = scmp.eq.s32.totalorder %s19, 1
      %p98 = por %p96, %p97
      %p99 = scmp.ne.s32.totalorder %s88, %s89
      %p100 = scmp.eq.s32.totalorder %s19, 0
      %p101 = por %p99, %p100
      %p102 = scmp.ne.s32.totalorder %s88, %s89
      %p103 = scmp.eq.s32.totalorder %s20, 1
      %p104 = por %p102, %p103
      %p106 = scmp.ne.s32.totalorder %s89, %s105
      %p107 = scmp.eq.s32.totalorder %s20, 0
      %p108 = por %p106, %p107
      %s109 = ssub.s32 %s21, %s40
      %p110 = scmp.eq.s32.totalorder %s109, 0
      %s112 = sadd.s32 %s111, 1
      %s113 = scalar_select %p110, %s111, %s112
      %p116 = pneg %p110
      %p117 = scmp.eq.s32.totalorder %s14, 1
      %p118 = por %p116, %p117
      %p119 = scmp.ne.s32.totalorder %s111, %s114
      %p120 = scmp.eq.s32.totalorder %s14, 0
      %p121 = por %p119, %p120
      %p122 = scmp.ne.s32.totalorder %s111, %s114
      %p123 = scmp.eq.s32.totalorder %s19, 1
      %p124 = por %p122, %p123
      %p125 = scmp.ne.s32.totalorder %s114, %s115
      %p126 = scmp.eq.s32.totalorder %s19, 0
      %p127 = por %p125, %p126
      %p128 = scmp.ne.s32.totalorder %s114, %s115
      %p129 = scmp.eq.s32.totalorder %s20, 1
      %p130 = por %p128, %p129
      %p132 = scmp.ne.s32.totalorder %s115, %s131
      %p133 = scmp.eq.s32.totalorder %s20, 0
      %p134 = por %p132, %p133
      %p135 = scmp.le.s32.totalorder 1, %s14
      %p136 = scmp.lt.s32.totalorder %s14, 3
      %p137 = pnand %p135, %p136
      %p138 = pneg %p137
      // Predicated region
      $region9: #{tpu_custom_call.1} parent=5 // pred_check
        _
      $region10: #{tpu_custom_call.1} parent=5 // pred_check_branch
        %140 = sbr.rel (%p137) target = $region12
      $region11: #{tpu_custom_call.1} parent=5 // pred_region
        %s141 = ssub.s32 %s14, 1
      $region12: #{tpu_custom_call.1} parent=5 // pred_fallthru
        _
      %p142 = scmp.lt.s32.totalorder %s14, 2
      // Predicated region
      $region13: #{tpu_custom_call.1} parent=5 // pred_check
        %p143 = pneg %p142
      $region14: #{tpu_custom_call.1} parent=5 // pred_check_branch
        %145 = sbr.rel (%p143) target = $region16
      $region15: #{tpu_custom_call.1} parent=5 // pred_region
        // Predicated region
        $region17: #{tpu_custom_call.1} parent=15 // pred_check
          %p146 = pneg %p61
        $region18: #{tpu_custom_call.1} parent=15 // pred_check_branch
          %148 = sbr.rel (%p146) target = $region20
        $region19: #{tpu_custom_call.1} parent=15 // pred_region
          %s149 = sand.u32 %s51, 1
          %s150 = scalar_lea.sflag [#allocation5], %s149
          %s151 = sand.u32 %s51, 1
          %s152 = smul.addr %s151, 8
          %s153 = scalar_lea.vmem [#allocation4], %s152
          %s154 = sadd.s32 %s21, %s23
          %p155 = scmp.lt.s32.totalorder %s154, 0
          %s156 = scalar_select %p155, %s154, 0
          %s157 = smul.u32 2, %s156
          %s159 = ssub.s32 128, 128
          %160 = vsyncadd %s150, %s159
          %s161 = smul.addr %s22, 2
          %s162 = sadd.s32 %s157, %s161
          %s163 = smul.addr %s162, 64
          %s164 = scalar_lea.hbm %s0, %s163
          %s166 = sshll.u32 %s153, 4
          %s167 = int_to_ptr.vmem [resolvable:$true] %s166
          %169 = dma.hbm_to_vmem [thread:$0]  %s164, 128, %s167, %s150
        $region20: #{tpu_custom_call.1} parent=15 // pred_fallthru
          _
        // Predicated region
        $region21: #{tpu_custom_call.1} parent=15 // pred_check
          %p170 = pneg %p95
        $region22: #{tpu_custom_call.1} parent=15 // pred_check_branch
          %172 = sbr.rel (%p170) target = $region24
        $region23: #{tpu_custom_call.1} parent=15 // pred_region
          %s173 = sand.u32 %s85, 1
          %s174 = scalar_lea.sflag [#allocation7], %s173
          %s175 = sand.u32 %s85, 1
          %s176 = smul.addr %s175, 2
          %s177 = scalar_lea.vmem [#allocation6], %s176
          %s178 = sadd.s32 %s21, %s23
          %p179 = scmp.lt.s32.totalorder %s178, 0
          %s180 = scalar_select %p179, %s178, 0
          %s181 = smul.u32 2, %s180
          %s183 = ssub.s32 32, 32
          %184 = vsyncadd %s174, %s183
          %s185 = smul.addr %s22, 2
          %s186 = sadd.s32 %s181, %s185
          %s187 = smul.addr %s186, 16
          %s188 = scalar_lea.hbm %s1, %s187
          %s190 = sshll.u32 %s177, 4
          %s191 = int_to_ptr.vmem [resolvable:$true] %s190
          %193 = dma.hbm_to_vmem [thread:$0]  %s188, 32, %s191, %s174
        $region24: #{tpu_custom_call.1} parent=15 // pred_fallthru
          _
      $region16: #{tpu_custom_call.1} parent=5 // pred_fallthru
        _
      %p194 = scmp.le.s32.totalorder 1, %s14
      %p195 = scmp.lt.s32.totalorder %s14, 3
      %p196 = pnand %p194, %p195
      %p197 = pneg %p196
      // Predicated region
      $region25: #{tpu_custom_call.1} parent=5 // pred_check
        _
      $region26: #{tpu_custom_call.1} parent=5 // pred_check_branch
        %199 = sbr.rel (%p196) target = $region28
      $region27: #{tpu_custom_call.1} parent=5 // pred_region
        %s200 = ssub.s32 %s14, 1
        %s201 = sand.u32 %s54, 1
        %s202 = scalar_lea.sflag [#allocation5], %s201
        %s203 = sand.u32 %s54, 1
        %s204 = smul.addr %s203, 8
        %s205 = scalar_lea.vmem [#allocation4], %s204
        // Predicated region
        $region29: #{tpu_custom_call.1} parent=27 // pred_check
          %p206 = pneg %p67
        $region30: #{tpu_custom_call.1} parent=27 // pred_check_branch
          %208 = sbr.rel (%p206) target = $region32
        $region31: #{tpu_custom_call.1} parent=27 // pred_region
          %209 = dma.done %s202, 128
        $region32: #{tpu_custom_call.1} parent=27 // pred_fallthru
          _
        %s210 = sand.u32 %s88, 1
        %s211 = scalar_lea.sflag [#allocation7], %s210
        %s212 = sand.u32 %s88, 1
        %s213 = smul.addr %s212, 2
        %s214 = scalar_lea.vmem [#allocation6], %s213
        // Predicated region
        $region33: #{tpu_custom_call.1} parent=27 // pred_check
          %p215 = pneg %p101
        $region34: #{tpu_custom_call.1} parent=27 // pred_check_branch
          %217 = sbr.rel (%p215) target = $region36
        $region35: #{tpu_custom_call.1} parent=27 // pred_region
          %218 = dma.done %s211, 32
        $region36: #{tpu_custom_call.1} parent=27 // pred_fallthru
          _
        %s219 = sand.u32 %s54, 1
        %s220 = scalar_lea.sflag [#allocation5], %s219
        %s221 = sand.u32 %s54, 1
        %s222 = smul.addr %s221, 8
        %s223 = scalar_lea.vmem [#allocation4], %s222
        %p224 = pneg %p67
        %p225 = pneg %p64
        %s226 = sand.u32 %s88, 1
        %s227 = scalar_lea.sflag [#allocation7], %s226
        %s228 = sand.u32 %s88, 1
        %s229 = smul.addr %s228, 2
        %s230 = scalar_lea.vmem [#allocation6], %s229
        %p231 = pneg %p101
        %p232 = pneg %p98
        %p233 = pneg %p127
        %p234 = pneg %p124
        %p235 = scmp.lt.s32.totalorder %s24, 0
        %s236 = scalar_select %p235, %s24, 0
        %s237 = smul.addr %s236, 4
        %s238 = scalar_lea.vmem %s2, %s237
        %s239 = sadd.s32 %s24, %s26
        %p240 = scmp.lt.s32.totalorder %s239, 0
        %s241 = scalar_select %p240, %s239, 0
        %s242 = smul.u32 2, %s241
        %s243 = sadd.s32 %s24, %s26
        %p244 = scmp.lt.s32.totalorder %s243, 0
        %s245 = scalar_select %p244, %s243, 0
        %s246 = smul.u32 2, %s245
        %p247 = scmp.lt.s32.totalorder %s24, 0
        %s248 = scalar_select %p247, %s24, 0
        %s249 = smul.addr %s248, 4
        %s250 = scalar_lea.vmem %s2, %s249
        %p251 = scmp.eq.s32.totalorder %s25, 0
        %p252 = scmp.eq.s32.totalorder %s26, 0
        %p253 = pnand %p251, %p252
        %p254 = pneg %p253
        // Predicated region
        $region37: #{tpu_custom_call.1} parent=27 // pred_check
          _
        $region38: #{tpu_custom_call.1} parent=27 // pred_check_branch
          %256 = sbr.rel (%p253) target = $region40
        $region39: #{tpu_custom_call.1} parent=27 // pred_region
          %vm257 = vcmask 3072
          %258 = vst.msk [vmem:[#allocation2] sm:$0xf] %vm257, 0.0
          %259 = vst.msk [vmem:[#allocation3] sm:$0xf] %vm257, 0.0
        $region40: #{tpu_custom_call.1} parent=27 // pred_fallthru
          _
        %v260 = vld [vmem:[%s205] sm:$0xff]
        %v262 = vcombine.high %v260, %v260
        %vm264 = vcmask 1043456
        %v265 = vsel %vm264, %v260, -inf
        %v266 = vrot.slane %v265, 4
        %v267 = vmax.f32 %v265, %v266
        %v268 = vrot.slane %v267, 2
        %v269 = vmax.f32 %v267, %v268
        %v270 = vrot.slane %v269, 1
        %v271 = vmax.f32 %v269, %v270
        %v272 = vsel %vm264, %v262, -inf
        %v273 = vrot.slane %v272, 4
        %v274 = vmax.f32 %v272, %v273
        %v275 = vrot.slane %v274, 2
        %v276 = vmax.f32 %v274, %v275
        %v277 = vrot.slane %v276, 1
        %v278 = vmax.f32 %v276, %v277
        %v281 = vcombine.low %v271, %v278
        %v283 = vsub.f32 %v260, %v281
        %v284 = vmul.f32 %v283, 1.442695
        %v285 = vpow.pop %v284
        %v287 = vcombine.high %v285, %v285
        %v289 = vsel %vm264, %v285, 0.0
        %v290 = vrot.slane %v289, 4
        %v291 = vadd.f32 %v289, %v290
        %v292 = vrot.slane %v291, 2
        %v293 = vadd.f32 %v291, %v292
        %v294 = vrot.slane %v293, 1
        %v295 = vadd.f32 %v293, %v294
        %v296 = vsel %vm264, %v287, 0.0
        %v297 = vrot.slane %v296, 4
        %v298 = vadd.f32 %v296, %v297
        %v299 = vrot.slane %v298, 2
        %v300 = vadd.f32 %v298, %v299
        %v301 = vrot.slane %v300, 1
        %v302 = vadd.f32 %v300, %v301
        %v303 = vrcp.pop %v295
        %v304 = vrcp.pop %v302
        %v307 = vcombine.low %v303, %v304
        %v309 = vmul.f32 %v285, %v307
        %v310 = vld [vmem:[%s214] sm:$0x3]
        %v311 = vlaneseq
        %v312 = vshrl.u32 %v311, 7
        %v313 = vlaneseq
        %v314 = vshrl.u32 %v313, 7
        %v315 = vsub.s32 0, %v314
        %v316 = vrot.slane %v310, %v315
        %v317 = vlaneseq
        %v318 = vshrl.u32 %v317, 7
        %v319 = vsub.s32 1, %v318
        %v320 = vrot.slane %v310, %v319
        %vm321 = vcmp.eq.s32.totalorder %v316, %v312
        %vm322 = vcmp.eq.s32.totalorder %v320, %v312
        %v323 = vsel %vm321, 1, 0
        %v324 = vsel %vm322, 1, 0
        %v325 = vcvt.s32.f32 %v323
        %v326 = vcvt.s32.f32 %v324
        %s327 = sadd.s32 %s24, %s26
        %s328 = smul.u32 %s327, 256
        %v329 = vlaneseq
        %v330 = vand.u32 %v329, 127
        %v331 = vadd.s32 %v330, 128
        %v332 = vstv %s328
        %v333 = vadd.s32 %v332, %v330
        %v334 = vadd.s32 %v332, %v331
        %vm335 = vcmp.lt.s32.totalorder %v333, 256
        %vm336 = vcmp.lt.s32.totalorder %v334, 256
        %v337 = vsel %vm335, 1, 0
        %v338 = vsel %vm336, 1, 0
        %vm339 = vcmp.eq.s32.totalorder %v337, 1
        %vm340 = vcmp.eq.s32.totalorder %v338, 1
        %v342 = vcombine.high %v309, %v309
        %v344 = vsel %vm339, %v309, 0.0
        %v345 = vsel %vm340, %v342, 0.0
        %v346 = vsel %vm339, %v325, 0.0
        %v347 = vsel %vm340, %v326, 0.0
        %v348 = vld [vmem:[#allocation2] sm:$0xf]
        %v349 = vmul.f32 %v344, %v346
        %v350 = vmul.f32 %v345, %v347
        %v351 = vsel %vm264, %v349, 0.0
        %v352 = vsel %vm264, %v350, 0.0
        %v353 = vadd.f32 %v351, %v352
        %354 = vadd.xlane.f32.xlu0 %v353
        %v355 = vpop.xlane.xlu0 %354
        %v356 = vadd.f32 %v348, %v355
        %vm357 = vcmask 3072
        %358 = vst.msk [vmem:[#allocation2] sm:$0xf] %vm357, %v356
        %v359 = vld [vmem:[#allocation3] sm:$0xf]
        %v360 = vadd.f32 %v344, %v346
        %v361 = vadd.f32 %v345, %v347
        %v362 = vsel %vm264, %v360, 0.0
        %v363 = vsel %vm264, %v361, 0.0
        %v364 = vadd.f32 %v362, %v363
        %365 = vadd.xlane.f32.xlu0 %v364
        %v366 = vpop.xlane.xlu0 %365
        %v367 = vadd.f32 %v359, %v366
        %368 = vst.msk [vmem:[#allocation3] sm:$0xf] %vm357, %v367
        %p369 = scmp.eq.s32.totalorder %s25, 1
        %p370 = pnand %p369, %p252
        %p371 = pneg %p370
        // Predicated region
        $region41: #{tpu_custom_call.1} parent=27 // pred_check
          _
        $region42: #{tpu_custom_call.1} parent=27 // pred_check_branch
          %373 = sbr.rel (%p370) target = $region44
        $region43: #{tpu_custom_call.1} parent=27 // pred_region
          %v374 = vld [vmem:[#allocation2] sm:$0xf]
          %v375 = vld [vmem:[#allocation3] sm:$0xf]
          %377 = vrot.lane.b32.xlu0 %v375, 1
          %v378 = vpop.permute.xlu0 %377
          %vm380 = vcmask 7168
          %v381 = vsel %vm380, %v374, %v378
          %vm382 = vcmask 11264
          %383 = vst.msk [vmem:[%s250] sm:$0xf] %vm382, %v381
        $region44: #{tpu_custom_call.1} parent=27 // pred_fallthru
          _
        %p384 = scmp.lt.s32.totalorder %s24, 0
        %s385 = scalar_select %p384, %s24, 0
        %s386 = smul.addr %s385, 4
        %s387 = scalar_lea.vmem %s2, %s386
        // Predicated region
        $region45: #{tpu_custom_call.1} parent=27 // pred_check
          %p388 = pneg %p124
        $region46: #{tpu_custom_call.1} parent=27 // pred_check_branch
          %390 = sbr.rel (%p388) target = $region48
        $region47: #{tpu_custom_call.1} parent=27 // pred_region
          _
        $region48: #{tpu_custom_call.1} parent=27 // pred_fallthru
          _
        // Predicated region
        $region49: #{tpu_custom_call.1} parent=27 // pred_check
          %p391 = pneg %p124
        $region50: #{tpu_custom_call.1} parent=27 // pred_check_branch
          %393 = sbr.rel (%p391) target = $region52
        $region51: #{tpu_custom_call.1} parent=27 // pred_region
          %p394 = scmp.lt.s32.totalorder %s24, 0
          %s395 = scalar_select %p394, %s24, 0
          %s396 = smul.addr %s395, 4
          %s397 = scalar_lea.vmem %s2, %s396
        $region52: #{tpu_custom_call.1} parent=27 // pred_fallthru
          _
      $region28: #{tpu_custom_call.1} parent=5 // pred_fallthru
        _
      %p398 = scmp.le.s32.totalorder 2, %s14
      // Predicated region
      $region53: #{tpu_custom_call.1} parent=5 // pred_check
        %p399 = pneg %p398
      $region54: #{tpu_custom_call.1} parent=5 // pred_check_branch
        %401 = sbr.rel (%p399) target = $region56
      $region55: #{tpu_custom_call.1} parent=5 // pred_region
        %s402 = ssub.s32 %s14, 2
      $region56: #{tpu_custom_call.1} parent=5 // pred_fallthru
        _
    $region6: #{tpu_custom_call.1} parent=1 // loop_footer
      %s18 = sadd.s32 1, %s14
    $region7: #{tpu_custom_call.1} parent=1 // loop_footer_branch
      %13 = sbr.rel target = $region3
    $region8: #{tpu_custom_call.1} parent=1 // loop_exit
      _
    %403 = vsyncpa [#allocation5], 1
    %s404 = scalar_lea.sflag [#allocation5], 1
    %405 = vsyncpa %s404, 1
    %406 = vsyncpa [#allocation7], 1
    %s407 = scalar_lea.sflag [#allocation7], 1
    %408 = vsyncpa %s407, 1

</llo_original>
